<compile_context>
chip_gen: v6e
topology: v6e:2x2x1
jax: 0.10.0
libtpu: 0.0.40
codegen_flags: <defaults>
</compile_context>

<pallas_src>
import functools

import jax
import jax.numpy as jnp
import numpy as np
from jax import lax
from jax.experimental import pallas as pl
from jax.experimental.pallas import tpu as pltpu


def _round_up(x, m):
    return ((x + m - 1) // m) * m


def _cnn_kernel(x_ref, w1_ref, w2_ref, wf1_ref, wf2_ref, bias_ref, o_ref,
                *, D1p, Hp, Cp):
    """Full forward pass for one batch block; four lane-dense MXU matmuls.

    x_ref    : (bn, Cin*L)      bf16  channel-major flattened input
    w1_ref   : (Cin*L, D1p)     bf16  banded conv1 weights (lane-padded)
    w2_ref   : (D1p, D1p)       bf16  banded conv2 weights
    wf1_ref  : (D1p, Hp)        bf16  fc1 weights (hidden lane-padded)
    wf2_ref  : (Hp, Cp)         bf16  fc2 weights (classes lane-padded)
    bias_ref : (4, BW)          f32   rows = [b1 | b2 | bf1 | bf2], lane-aligned
    o_ref    : (bn, Cp)         f32   lane-dense logits block
    """
    mm = jnp.bfloat16
    b1 = bias_ref[0:1, 0:D1p]
    b2 = bias_ref[1:2, 0:D1p]
    bf1 = bias_ref[2:3, 0:Hp]
    bf2 = bias_ref[3:4, 0:Cp]

    # conv1 ('same') + bias + ReLU  (dropout = identity)
    h1 = jnp.dot(x_ref[...], w1_ref[...], preferred_element_type=jnp.float32)
    h1 = jnp.maximum(h1 + b1, 0.0).astype(mm)
    # conv2 ('same') + bias + ReLU
    h2 = jnp.dot(h1, w2_ref[...], preferred_element_type=jnp.float32)
    h2 = jnp.maximum(h2 + b2, 0.0).astype(mm)
    # flatten is already the channel-major layout -> fc1 + ReLU
    z1 = jnp.dot(h2, wf1_ref[...], preferred_element_type=jnp.float32)
    z1 = jnp.maximum(z1 + bf1, 0.0).astype(mm)
    # fc2
    out = jnp.dot(z1, wf2_ref[...], preferred_element_type=jnp.float32) + bf2
    o_ref[...] = out.astype(o_ref.dtype)


def _conv_band(w_pt, L, left):
    """PyTorch Conv1d('same') weights (Cout, Cin, K) -> banded (Cin*L, Cout*L).

    Band[ci*L + li, co*L + lo] = w_pt[co, ci, li - lo + left] when in range,
    else 0, so  out_flat = x_flat @ Band  reproduces the 'same' convolution on
    channel-major flattened tensors.
    """
    Cout, Cin, K = w_pt.shape
    li = jnp.arange(L)[:, None]           # input position
    lo = jnp.arange(L)[None, :]           # output position
    k = li - lo + left                    # (L, L) tap index
    valid = (k >= 0) & (k < K)
    kc = jnp.clip(k, 0, K - 1)
    w = jnp.transpose(w_pt, (1, 2, 0))    # (Cin, K, Cout)
    band = w[:, kc, :]                    # (Cin, li, lo, Cout)
    band = jnp.where(valid[None, :, :, None], band, 0.0)
    band = jnp.transpose(band, (0, 1, 3, 2))   # (Cin, li, Cout, lo)
    return band.reshape(Cin * L, Cout * L)


def cnn_forward(x_ncl, params, *, kernel_size, batch_block=None):
    """x_ncl: (N, Cin, L) float32, PyTorch NCL convention. Returns (N, ncls)."""
    w1_pt, b1, w2_pt, b2, wf1_pt, bf1, wf2_pt, bf2 = params
    N, Cin, L = x_ncl.shape
    K = kernel_size
    Cout = w1_pt.shape[0]
    H = wf1_pt.shape[0]
    ncls = wf2_pt.shape[0]
    left = (K - 1) // 2

    D0 = Cin * L                      # input flatten width
    D1 = Cout * L                     # conv output flatten width
    D1p = _round_up(D1, 128)          # lane-padded widths
    Hp = _round_up(H, 128)
    Cp = _round_up(ncls, 128)
    BW = max(D1p, Hp, Cp)

    # batch block: whole batch by default (single grid step on v5e/v6e).
    # On v7x pass batch_block = N // 2 so the "parallel" grid uses both TCs.
    if batch_block is None:
        batch_block = N if N <= 1024 else (512 if N % 512 == 0 else N)
    bn = batch_block
    assert N % bn == 0 and (bn == N or bn % 8 == 0), (N, bn)

    # ---- wrapper-side operand prep (tiny, done once per weight set) --------
    x_flat = x_ncl.reshape(N, D0).astype(jnp.bfloat16)   # channel-major flatten

    W1 = jnp.zeros((D0, D1p), jnp.float32).at[:, :D1].set(_conv_band(w1_pt, L, left))
    W2 = jnp.zeros((D1p, D1p), jnp.float32).at[:D1, :D1].set(_conv_band(w2_pt, L, left))
    WF1 = jnp.zeros((D1p, Hp), jnp.float32).at[:D1, :H].set(wf1_pt.T)
    WF2 = jnp.zeros((Hp, Cp), jnp.float32).at[:H, :ncls].set(wf2_pt.T)
    W1, W2, WF1, WF2 = (w.astype(jnp.bfloat16) for w in (W1, W2, WF1, WF2))

    bias = jnp.zeros((4, BW), jnp.float32)
    bias = bias.at[0, :D1].set(jnp.repeat(b1, L))        # b1[co] for index co*L+lo
    bias = bias.at[1, :D1].set(jnp.repeat(b2, L))
    bias = bias.at[2, :H].set(bf1)
    bias = bias.at[3, :ncls].set(bf2)

    kernel = functools.partial(_cnn_kernel, D1p=D1p, Hp=Hp, Cp=Cp)
    out_pad = pl.pallas_call(
        kernel,
        out_shape=jax.ShapeDtypeStruct((N, Cp), jnp.float32),
        grid=(N // bn,),
        in_specs=[
            pl.BlockSpec((bn, D0), lambda i: (i, 0)),
            pl.BlockSpec((D0, D1p), lambda i: (0, 0)),
            pl.BlockSpec((D1p, D1p), lambda i: (0, 0)),
            pl.BlockSpec((D1p, Hp), lambda i: (0, 0)),
            pl.BlockSpec((Hp, Cp), lambda i: (0, 0)),
            pl.BlockSpec((4, BW), lambda i: (0, 0)),
        ],
        out_specs=pl.BlockSpec((bn, Cp), lambda i: (i, 0)),
        compiler_params=pltpu.CompilerParams(
            dimension_semantics=("parallel",)),
    )(x_flat, W1, W2, WF1, WF2, bias)
    return out_pad[:, :ncls]


def cnn_reference(x_ncl, params, *, kernel_size):
    """Pure-JAX f32 reference matching PyTorch semantics (eval mode)."""
    w1_pt, b1, w2_pt, b2, wf1_pt, bf1, wf2_pt, bf2 = params
    K = kernel_size
    left = (K - 1) // 2
    right = (K - 1) - left
    dn = ('NCH', 'OIH', 'NCH')

    h = lax.conv_general_dilated(x_ncl, w1_pt, (1,), [(left, right)],
                                 dimension_numbers=dn)
    h = jnp.maximum(h + b1[None, :, None], 0.0)
    h = lax.conv_general_dilated(h, w2_pt, (1,), [(left, right)],
                                 dimension_numbers=dn)
    h = jnp.maximum(h + b2[None, :, None], 0.0)
    f = h.reshape(h.shape[0], -1)                        # (N, Cout*L), c-major
    z = jnp.maximum(f @ wf1_pt.T + bf1, 0.0)
    return z @ wf2_pt.T + bf2


if __name__ == "__main__":
    in_channels, out_channels = 4, 8
    hidden_size, input_size = 32, 16
    num_classes, kernel_size = 5, 3
    batch = 16

    key = jax.random.PRNGKey(0)
    ks = jax.random.split(key, 9)
    params = (
        jax.random.normal(ks[0], (out_channels, in_channels, kernel_size), jnp.float32) * 0.2,   # conv1 w
        jax.random.normal(ks[1], (out_channels,), jnp.float32) * 0.1,                            # conv1 b
        jax.random.normal(ks[2], (out_channels, out_channels, kernel_size), jnp.float32) * 0.2,  # conv2 w
        jax.random.normal(ks[3], (out_channels,), jnp.float32) * 0.1,                            # conv2 b
        jax.random.normal(ks[4], (hidden_size, input_size * out_channels), jnp.float32) * 0.1,   # fc1 w
        jax.random.normal(ks[5], (hidden_size,), jnp.float32) * 0.1,                             # fc1 b
        jax.random.normal(ks[6], (num_classes, hidden_size), jnp.float32) * 0.1,                 # fc2 w
        jax.random.normal(ks[7], (num_classes,), jnp.float32) * 0.1,                             # fc2 b
    )
    x = jax.random.normal(ks[8], (batch, in_channels, input_size), jnp.float32)

    out = jax.block_until_ready(cnn_forward(x, params, kernel_size=kernel_size))
    ref = jax.block_until_ready(cnn_reference(x, params, kernel_size=kernel_size))
    assert out.shape == (batch, num_classes), out.shape
    # bf16 matmul operands (f32 accumulation) -> bf16-level tolerance vs f32 ref.
    np.testing.assert_allclose(np.asarray(out), np.asarray(ref), rtol=3e-2, atol=3e-2)

    print("KERNEL_OK")
</pallas_src>

<mosaic_0001>
module attributes {stable_mosaic.version = 11 : i64} {
  func.func @_cnn_kernel(%arg0: i32, %arg1: memref<16x64xbf16, #tpu.memory_space<vmem>>, %arg2: memref<64x128xbf16, #tpu.memory_space<vmem>>, %arg3: memref<128x128xbf16, #tpu.memory_space<vmem>>, %arg4: memref<128x128xbf16, #tpu.memory_space<vmem>>, %arg5: memref<128x128xbf16, #tpu.memory_space<vmem>>, %arg6: memref<4x128xf32, #tpu.memory_space<vmem>>, %arg7: memref<16x128xf32, #tpu.memory_space<vmem>>) attributes {dimension_semantics = [#tpu.dimension_semantics<parallel>], iteration_bounds = array<i64: 1>, scalar_prefetch = 0 : i64, scratch_operands = 0 : i64, tpu.core_type = #tpu.core_type<tc>, window_params = [{transform_indices = @transform_0, window_bounds = array<i64: 16, 64>}, {pipeline_mode = #tpu.pipeline_mode<synchronous>, transform_indices = @transform_1, window_bounds = array<i64: 64, 128>}, {pipeline_mode = #tpu.pipeline_mode<synchronous>, transform_indices = @transform_2, window_bounds = array<i64: 128, 128>}, {pipeline_mode = #tpu.pipeline_mode<synchronous>, transform_indices = @transform_3, window_bounds = array<i64: 128, 128>}, {pipeline_mode = #tpu.pipeline_mode<synchronous>, transform_indices = @transform_4, window_bounds = array<i64: 128, 128>}, {pipeline_mode = #tpu.pipeline_mode<synchronous>, transform_indices = @transform_5, window_bounds = array<i64: 4, 128>}, {transform_indices = @transform_6, window_bounds = array<i64: 16, 128>}]} {
    %c0 = arith.constant 0 : index
    %c0_0 = arith.constant 0 : index
    %0 = vector.load %arg6[%c0, %c0_0] : memref<4x128xf32, #tpu.memory_space<vmem>>, vector<1x128xf32>
    %c1 = arith.constant 1 : index
    %c0_1 = arith.constant 0 : index
    %1 = vector.load %arg6[%c1, %c0_1] : memref<4x128xf32, #tpu.memory_space<vmem>>, vector<1x128xf32>
    %c2 = arith.constant 2 : index
    %c0_2 = arith.constant 0 : index
    %2 = vector.load %arg6[%c2, %c0_2] : memref<4x128xf32, #tpu.memory_space<vmem>>, vector<1x128xf32>
    %c3 = arith.constant 3 : index
    %c0_3 = arith.constant 0 : index
    %3 = vector.load %arg6[%c3, %c0_3] : memref<4x128xf32, #tpu.memory_space<vmem>>, vector<1x128xf32>
    %c0_4 = arith.constant 0 : index
    %c0_5 = arith.constant 0 : index
    %4 = vector.load %arg1[%c0_4, %c0_5] : memref<16x64xbf16, #tpu.memory_space<vmem>>, vector<16x64xbf16>
    %c0_6 = arith.constant 0 : index
    %c0_7 = arith.constant 0 : index
    %5 = vector.load %arg2[%c0_6, %c0_7] : memref<64x128xbf16, #tpu.memory_space<vmem>>, vector<64x128xbf16>
    %cst = arith.constant dense<0.000000e+00> : vector<16x128xf32>
    %6 = tpu.matmul %4, %5, %cst {dimension_numbers = #tpu.dot_dimension_numbers<[1], [0], [0], [1], [0, 0, 1, 1], [], []>} : vector<16x64xbf16>, vector<64x128xbf16>, vector<16x128xf32> -> vector<16x128xf32>
    %7 = vector.broadcast %0 : vector<1x128xf32> to vector<16x128xf32>
    %8 = arith.addf %6, %7 : vector<16x128xf32>
    %cst_8 = arith.constant 0.000000e+00 : f32
    %9 = vector.broadcast %cst_8 : f32 to vector<16x128xf32>
    %10 = arith.maximumf %8, %9 : vector<16x128xf32>
    %11 = arith.truncf %10 : vector<16x128xf32> to vector<16x128xbf16>
    %c0_9 = arith.constant 0 : index
    %c0_10 = arith.constant 0 : index
    %12 = vector.load %arg3[%c0_9, %c0_10] : memref<128x128xbf16, #tpu.memory_space<vmem>>, vector<128x128xbf16>
    %cst_11 = arith.constant dense<0.000000e+00> : vector<16x128xf32>
    %13 = tpu.matmul %11, %12, %cst_11 {dimension_numbers = #tpu.dot_dimension_numbers<[1], [0], [0], [1], [0, 0, 1, 1], [], []>} : vector<16x128xbf16>, vector<128x128xbf16>, vector<16x128xf32> -> vector<16x128xf32>
    %14 = vector.broadcast %1 : vector<1x128xf32> to vector<16x128xf32>
    %15 = arith.addf %13, %14 : vector<16x128xf32>
    %cst_12 = arith.constant 0.000000e+00 : f32
    %16 = vector.broadcast %cst_12 : f32 to vector<16x128xf32>
    %17 = arith.maximumf %15, %16 : vector<16x128xf32>
    %18 = arith.truncf %17 : vector<16x128xf32> to vector<16x128xbf16>
    %c0_13 = arith.constant 0 : index
    %c0_14 = arith.constant 0 : index
    %19 = vector.load %arg4[%c0_13, %c0_14] : memref<128x128xbf16, #tpu.memory_space<vmem>>, vector<128x128xbf16>
    %cst_15 = arith.constant dense<0.000000e+00> : vector<16x128xf32>
    %20 = tpu.matmul %18, %19, %cst_15 {dimension_numbers = #tpu.dot_dimension_numbers<[1], [0], [0], [1], [0, 0, 1, 1], [], []>} : vector<16x128xbf16>, vector<128x128xbf16>, vector<16x128xf32> -> vector<16x128xf32>
    %21 = vector.broadcast %2 : vector<1x128xf32> to vector<16x128xf32>
    %22 = arith.addf %20, %21 : vector<16x128xf32>
    %cst_16 = arith.constant 0.000000e+00 : f32
    %23 = vector.broadcast %cst_16 : f32 to vector<16x128xf32>
    %24 = arith.maximumf %22, %23 : vector<16x128xf32>
    %25 = arith.truncf %24 : vector<16x128xf32> to vector<16x128xbf16>
    %c0_17 = arith.constant 0 : index
    %c0_18 = arith.constant 0 : index
    %26 = vector.load %arg5[%c0_17, %c0_18] : memref<128x128xbf16, #tpu.memory_space<vmem>>, vector<128x128xbf16>
    %cst_19 = arith.constant dense<0.000000e+00> : vector<16x128xf32>
    %27 = tpu.matmul %25, %26, %cst_19 {dimension_numbers = #tpu.dot_dimension_numbers<[1], [0], [0], [1], [0, 0, 1, 1], [], []>} : vector<16x128xbf16>, vector<128x128xbf16>, vector<16x128xf32> -> vector<16x128xf32>
    %28 = vector.broadcast %3 : vector<1x128xf32> to vector<16x128xf32>
    %29 = arith.addf %27, %28 : vector<16x128xf32>
    %c0_20 = arith.constant 0 : index
    %c0_21 = arith.constant 0 : index
    %30 = vector.load %arg7[%c0_20, %c0_21] : memref<16x128xf32, #tpu.memory_space<vmem>>, vector<16x128xf32>
    tpu.vector_store %arg7[%c0_20, %c0_21], %29 {strides = array<i32>} : memref<16x128xf32, #tpu.memory_space<vmem>>, vector<16x128xf32>,
    return
  }
  func.func @transform_0(%arg0: i32) -> (i32, i32) {
    %c0_i32 = arith.constant 0 : i32
    %c0_i32_0 = arith.constant 0 : i32
    return %arg0, %c0_i32 : i32, i32
  }
  func.func @transform_1(%arg0: i32) -> (i32, i32) {
    %c0_i32 = arith.constant 0 : i32
    %c0_i32_0 = arith.constant 0 : i32
    %c0_i32_1 = arith.constant 0 : i32
    return %c0_i32, %c0_i32_0 : i32, i32
  }
  func.func @transform_2(%arg0: i32) -> (i32, i32) {
    %c0_i32 = arith.constant 0 : i32
    %c0_i32_0 = arith.constant 0 : i32
    %c0_i32_1 = arith.constant 0 : i32
    return %c0_i32, %c0_i32_0 : i32, i32
  }
  func.func @transform_3(%arg0: i32) -> (i32, i32) {
    %c0_i32 = arith.constant 0 : i32
    %c0_i32_0 = arith.constant 0 : i32
    %c0_i32_1 = arith.constant 0 : i32
    return %c0_i32, %c0_i32_0 : i32, i32
  }
  func.func @transform_4(%arg0: i32) -> (i32, i32) {
    %c0_i32 = arith.constant 0 : i32
    %c0_i32_0 = arith.constant 0 : i32
    %c0_i32_1 = arith.constant 0 : i32
    return %c0_i32, %c0_i32_0 : i32, i32
  }
  func.func @transform_5(%arg0: i32) -> (i32, i32) {
    %c0_i32 = arith.constant 0 : i32
    %c0_i32_0 = arith.constant 0 : i32
    %c0_i32_1 = arith.constant 0 : i32
    return %c0_i32, %c0_i32_0 : i32, i32
  }
  func.func @transform_6(%arg0: i32) -> (i32, i32) {
    %c0_i32 = arith.constant 0 : i32
    %c0_i32_0 = arith.constant 0 : i32
    return %arg0, %c0_i32 : i32, i32
  }
}

</mosaic_0001>

<llo_original>
// kernel: tpu_custom_call.1
$region0: #{tpu_custom_call.1}
  #allocation0 [shape = 'u32[]', space=smem, size = 0x4, offset = 0x4, fixed_abs, tag = 'smem constant byte address 0x4 - core index']
  #allocation1 [shape = 'u32[144,128]{1,0:T(1,128)}', space=vmem, size = 0x12000, scoped, tag = 'internal scratch']
  %s0 = inlined_call_operand.hbm [shape: bf16[16,64], index: 0, kind: input, shape index: {}]
  %s1 = inlined_call_operand.hbm [shape: bf16[64,128], index: 1, kind: input, shape index: {}]
  %s2 = inlined_call_operand.hbm [shape: bf16[128,128], index: 2, kind: input, shape index: {}]
  %s3 = inlined_call_operand.hbm [shape: bf16[128,128], index: 3, kind: input, shape index: {}]
  %s4 = inlined_call_operand.hbm [shape: bf16[128,128], index: 4, kind: input, shape index: {}]
  %s5 = inlined_call_operand.vmem [shape: f32[4,128], index: 5, kind: input, shape index: {}]
  %s6 = inlined_call_operand.hbm [shape: f32[16,128], index: 6, kind: output, shape index: {}]
  %s7 = sld [smem:[#allocation0]]
  $region54: #{tpu_custom_call.1} parent=0
    _
  %s9 = ssub.s32 1, %s7
  %s10 = scalar_select 0, %s9, %s7
  $region1: #{tpu_custom_call.1} parent=0
    #allocation2 [shape = 'u8[4096]{0}', space=vmem, size = 0x1000, scoped, tag = 'input window, operand 0, single buffered']
    #allocation3 [shape = 's32[1]{0}', space=sflag, size = 0x4, scoped, tag = 'scoped memory for tpu_custom_call.1']
    #allocation4 [shape = 's32[1]{0}', space=sflag, size = 0x4, scoped, tag = 'scoped memory for tpu_custom_call.1']
    #allocation5 [shape = 'u8[16384]{0}', space=vmem, size = 0x4000, scoped, tag = 'input window, operand 1, single buffered']
    #allocation6 [shape = 's32[1]{0}', space=sflag, size = 0x4, scoped, tag = 'scoped memory for tpu_custom_call.1']
    #allocation7 [shape = 'u8[32768]{0}', space=vmem, size = 0x8000, scoped, tag = 'input window, operand 2, single buffered']
    #allocation8 [shape = 'u8[32768]{0}', space=vmem, size = 0x8000, scoped, tag = 'input window, operand 3, single buffered']
    #allocation9 [shape = 's32[1]{0}', space=sflag, size = 0x4, scoped, tag = 'scoped memory for tpu_custom_call.1']
    #allocation10 [shape = 'u8[32768]{0}', space=vmem, size = 0x8000, scoped, tag = 'input window, operand 4, single buffered']
    #allocation11 [shape = 'u8[8192]{0}', space=vmem, size = 0x2000, scoped, tag = 'output window, operand 0, single buffered']
    %11 = vsyncpa [#allocation3], 0
    %12 = vsyncpa [#allocation6], 0
    %13 = vsyncpa [#allocation9], 0
    %14 = vsyncpa [#allocation4], 0
    // Predicated region
    $region2: #{tpu_custom_call.1} parent=1 // pred_check
      _
    $region3: #{tpu_custom_call.1} parent=1 // pred_check_branch
      %16 = sbr.rel (0) target = $region5
    $region4: #{tpu_custom_call.1} parent=1 // pred_region
      %s18 = ssub.s32 128, 128
      %19 = vsyncadd [#allocation3], %s18
      %s20 = sshll.u32 [#allocation2], 4
      %s21 = int_to_ptr.vmem [resolvable:$true] %s20
      %26 = dma.hbm_to_vmem [thread:$0]  %s0, 128, %s21, [#allocation3], 64, 64, 4
    $region5: #{tpu_custom_call.1} parent=1 // pred_fallthru
      _
    // Predicated region
    $region6: #{tpu_custom_call.1} parent=1 // pred_check
      _
    $region7: #{tpu_custom_call.1} parent=1 // pred_check_branch
      %28 = sbr.rel (0) target = $region9
    $region8: #{tpu_custom_call.1} parent=1 // pred_region
      %s30 = ssub.s32 512, 512
      %31 = vsyncadd [#allocation6], %s30
      %s32 = sshll.u32 [#allocation5], 4
      %s33 = int_to_ptr.vmem [resolvable:$true] %s32
      %38 = dma.hbm_to_vmem [thread:$0]  %s1, 512, %s33, [#allocation6], 64, 64, 4
    $region9: #{tpu_custom_call.1} parent=1 // pred_fallthru
      _
    // Predicated region
    $region10: #{tpu_custom_call.1} parent=1 // pred_check
      _
    $region11: #{tpu_custom_call.1} parent=1 // pred_check_branch
      %40 = sbr.rel (0) target = $region13
    $region12: #{tpu_custom_call.1} parent=1 // pred_region
      %s42 = ssub.s32 1024, 1024
      %43 = vsyncadd [#allocation6], %s42
      %s44 = sshll.u32 [#allocation7], 4
      %s45 = int_to_ptr.vmem [resolvable:$true] %s44
      %50 = dma.hbm_to_vmem [thread:$0]  %s2, 1024, %s45, [#allocation6], 64, 64, 4
    $region13: #{tpu_custom_call.1} parent=1 // pred_fallthru
      _
    // Predicated region
    $region14: #{tpu_custom_call.1} parent=1 // pred_check
      _
    $region15: #{tpu_custom_call.1} parent=1 // pred_check_branch
      %52 = sbr.rel (0) target = $region17
    $region16: #{tpu_custom_call.1} parent=1 // pred_region
      %s54 = ssub.s32 1024, 1024
      %55 = vsyncadd [#allocation9], %s54
      %s56 = sshll.u32 [#allocation8], 4
      %s57 = int_to_ptr.vmem [resolvable:$true] %s56
      %62 = dma.hbm_to_vmem [thread:$0]  %s3, 1024, %s57, [#allocation9], 64, 64, 4
    $region17: #{tpu_custom_call.1} parent=1 // pred_fallthru
      _
    // Predicated region
    $region18: #{tpu_custom_call.1} parent=1 // pred_check
      _
    $region19: #{tpu_custom_call.1} parent=1 // pred_check_branch
      %64 = sbr.rel (0) target = $region21
    $region20: #{tpu_custom_call.1} parent=1 // pred_region
      %s66 = ssub.s32 1024, 1024
      %67 = vsyncadd [#allocation9], %s66
      %s68 = sshll.u32 [#allocation10], 4
      %s69 = int_to_ptr.vmem [resolvable:$true] %s68
      %74 = dma.hbm_to_vmem [thread:$0]  %s4, 1024, %s69, [#allocation9], 64, 64, 4
    $region21: #{tpu_custom_call.1} parent=1 // pred_fallthru
      _
    // Predicated region
    $region22: #{tpu_custom_call.1} parent=1 // pred_check
      _
    $region23: #{tpu_custom_call.1} parent=1 // pred_check_branch
      %76 = sbr.rel (0) target = $region25
    $region24: #{tpu_custom_call.1} parent=1 // pred_region
      _
    $region25: #{tpu_custom_call.1} parent=1 // pred_fallthru
      _
    // Predicated region
    $region26: #{tpu_custom_call.1} parent=1 // pred_check
      _
    $region27: #{tpu_custom_call.1} parent=1 // pred_check_branch
      %78 = sbr.rel (0) target = $region29
    $region28: #{tpu_custom_call.1} parent=1 // pred_region
      %79 = dma.done [#allocation3], 128
    $region29: #{tpu_custom_call.1} parent=1 // pred_fallthru
      _
    // Predicated region
    $region30: #{tpu_custom_call.1} parent=1 // pred_check
      _
    $region31: #{tpu_custom_call.1} parent=1 // pred_check_branch
      %81 = sbr.rel (0) target = $region33
    $region32: #{tpu_custom_call.1} parent=1 // pred_region
      %82 = dma.done [#allocation6], 512
    $region33: #{tpu_custom_call.1} parent=1 // pred_fallthru
      _
    // Predicated region
    $region34: #{tpu_custom_call.1} parent=1 // pred_check
      _
    $region35: #{tpu_custom_call.1} parent=1 // pred_check_branch
      %84 = sbr.rel (0) target = $region37
    $region36: #{tpu_custom_call.1} parent=1 // pred_region
      %85 = dma.done [#allocation6], 1024
    $region37: #{tpu_custom_call.1} parent=1 // pred_fallthru
      _
    // Predicated region
    $region38: #{tpu_custom_call.1} parent=1 // pred_check
      _
    $region39: #{tpu_custom_call.1} parent=1 // pred_check_branch
      %87 = sbr.rel (0) target = $region41
    $region40: #{tpu_custom_call.1} parent=1 // pred_region
      %88 = dma.done [#allocation9], 1024
    $region41: #{tpu_custom_call.1} parent=1 // pred_fallthru
      _
    // Predicated region
    $region42: #{tpu_custom_call.1} parent=1 // pred_check
      _
    $region43: #{tpu_custom_call.1} parent=1 // pred_check_branch
      %90 = sbr.rel (0) target = $region45
    $region44: #{tpu_custom_call.1} parent=1 // pred_region
      %91 = dma.done [#allocation9], 1024
    $region45: #{tpu_custom_call.1} parent=1 // pred_fallthru
      _
    %v93 = vld [vmem:[%s5] sm:$0x1]
    %v94 = vld [vmem:[%s5 + $0x1] sm:$0x1]
    %v95 = vld [vmem:[%s5 + $0x2] sm:$0x1]
    %v96 = vld [vmem:[%s5 + $0x3] sm:$0x1]
    %v97 = vld [vmem:[#allocation2] sm:$0xf]
    %v98 = vld [vmem:[#allocation2 + $0x4] sm:$0xf]
    %v99 = vld [vmem:[#allocation5] sm:$0xf]
    %v100 = vld [vmem:[#allocation5 + $0x4] sm:$0xf]
    %v101 = vld [vmem:[#allocation5 + $0x8] sm:$0xf]
    %v102 = vld [vmem:[#allocation5 + $0xc] sm:$0xf]
    %v103 = vld [vmem:[#allocation5 + $0x10] sm:$0xf]
    %v104 = vld [vmem:[#allocation5 + $0x14] sm:$0xf]
    %v105 = vld [vmem:[#allocation5 + $0x18] sm:$0xf]
    %v106 = vld [vmem:[#allocation5 + $0x1c] sm:$0xf]
    %v107 = vlaneseq
    %v108 = vshrl.u32 %v107, 7
    %v109 = vsub.s32 0, %v108
    %v110 = vrot.slane %v93, %v109
    %v113 = vunpack.c.l.b16 %v97
    %v114 = vunpack.c.l.b16 %v98
    %v115 = vpack.c.b16 %v114, %v113
    %v124 = vunpack.c.l.b16 %v99
    %v125 = vunpack.c.l.b16 %v100
    %v126 = vunpack.c.l.b16 %v101
    %v127 = vunpack.c.l.b16 %v102
    %v128 = vunpack.c.l.b16 %v103
    %v129 = vunpack.c.l.b16 %v104
    %v130 = vunpack.c.l.b16 %v105
    %v131 = vunpack.c.l.b16 %v106
    %v132 = vpack.c.b16 %v125, %v124
    %v133 = vpack.c.b16 %v127, %v126
    %v134 = vpack.c.b16 %v129, %v128
    %v135 = vpack.c.b16 %v131, %v130
    %vm140 = vcmask 523264
    %v142 = vsel %vm140, %v115, 0
    %144 = vmatprep.subr.bf16.mxu0 0
    %145 = vmatpush1.bf16.msra.mxu0 0
    %146 = vmatprep.subr.bf16.mxu0 0
    %147 = vmatpush1.bf16.msra.mxu0 0
    %148 = vmatprep.subr.bf16.mxu0 0
    %149 = vmatpush1.bf16.msra.mxu0 0
    %150 = vmatprep.subr.bf16.mxu0 0
    %151 = vmatpush1.bf16.msra.mxu0 0
    %152 = vmatprep.subr.bf16.mxu0 0
    %153 = vmatpush1.bf16.msra.mxu0 %v135
    %154 = vmatprep.subr.bf16.mxu0 0
    %155 = vmatpush1.bf16.msra.mxu0 %v134
    %156 = vmatprep.subr.bf16.mxu0 0
    %157 = vmatpush1.bf16.msra.mxu0 %v133
    %158 = vmatprep.subr.bf16.mxu0 0
    %159 = vmatpush1.bf16.msra.mxu0 %v132
    %160 = vmatprep.subr.bf16.mxu0 0
    %161 = vmatpush2.bf16.msra.mxu0 0
    %162 = vmatprep.subr.bf16.mxu0 0
    %163 = vmatpush2.bf16.msra.mxu0 0
    %164 = vmatprep.subr.bf16.mxu0 0
    %165 = vmatpush2.bf16.msra.mxu0 0
    %166 = vmatprep.subr.bf16.mxu0 0
    %167 = vmatpush2.bf16.msra.mxu0 0
    %168 = vmatprep.subr.bf16.mxu0 0
    %169 = vmatpush2.bf16.msra.mxu0 0
    %170 = vmatprep.subr.bf16.mxu0 0
    %171 = vmatpush2.bf16.msra.mxu0 0
    %172 = vmatprep.subr.bf16.mxu0 0
    %173 = vmatpush2.bf16.msra.mxu0 0
    %174 = vmatprep.subr.bf16.mxu0 0
    %175 = vmatpush2.bf16.msra.mxu0 0
    %176 = vmatprep.mubr.bf16.mxu0 0
    %177 = vmatmul.mubr.bf16.gmra.mxu0 %v142
    %v178 = vpop.f32.mrf.mxu0
    %v179 = vadd.f32 %v110, %v178
    %v180 = vpop.f32.mrf.mxu0
    %v181 = vpop.f32.mrf.mxu0
    %v182 = vadd.f32 %v110, %v181
    %v183 = vpop.f32.mrf.mxu0
    %184 = vdwg.mxu0
    %v185 = vmax.f32 %v179, 0.0
    %v186 = vmax.f32 %v182, 0.0
    %v187 = vpack.c.bf16 %v186, %v185
    %v188 = vld [vmem:[#allocation7] sm:$0xf]
    %v189 = vld [vmem:[#allocation7 + $0x4] sm:$0xf]
    %v190 = vld [vmem:[#allocation7 + $0x8] sm:$0xf]
    %v191 = vld [vmem:[#allocation7 + $0xc] sm:$0xf]
    %v192 = vld [vmem:[#allocation7 + $0x10] sm:$0xf]
    %v193 = vld [vmem:[#allocation7 + $0x14] sm:$0xf]
    %v194 = vld [vmem:[#allocation7 + $0x18] sm:$0xf]
    %v195 = vld [vmem:[#allocation7 + $0x1c] sm:$0xf]
    %v196 = vld [vmem:[#allocation7 + $0x20] sm:$0xf]
    %v197 = vld [vmem:[#allocation7 + $0x24] sm:$0xf]
    %v198 = vld [vmem:[#allocation7 + $0x28] sm:$0xf]
    %v199 = vld [vmem:[#allocation7 + $0x2c] sm:$0xf]
    %v200 = vld [vmem:[#allocation7 + $0x30] sm:$0xf]
    %v201 = vld [vmem:[#allocation7 + $0x34] sm:$0xf]
    %v202 = vld [vmem:[#allocation7 + $0x38] sm:$0xf]
    %v203 = vld [vmem:[#allocation7 + $0x3c] sm:$0xf]
    %v204 = vlaneseq
    %v205 = vshrl.u32 %v204, 7
    %v206 = vsub.s32 0, %v205
    %v207 = vrot.slane %v94, %v206
    %v224 = vunpack.c.l.b16 %v188
    %v225 = vunpack.c.l.b16 %v189
    %v226 = vunpack.c.l.b16 %v190
    %v227 = vunpack.c.l.b16 %v191
    %v228 = vunpack.c.l.b16 %v192
    %v229 = vunpack.c.l.b16 %v193
    %v230 = vunpack.c.l.b16 %v194
    %v231 = vunpack.c.l.b16 %v195
    %v232 = vunpack.c.l.b16 %v196
    %v233 = vunpack.c.l.b16 %v197
    %v234 = vunpack.c.l.b16 %v198
    %v235 = vunpack.c.l.b16 %v199
    %v236 = vunpack.c.l.b16 %v200
    %v237 = vunpack.c.l.b16 %v201
    %v238 = vunpack.c.l.b16 %v202
    %v239 = vunpack.c.l.b16 %v203
    %v240 = vpack.c.b16 %v225, %v224
    %v241 = vpack.c.b16 %v227, %v226
    %v242 = vpack.c.b16 %v229, %v228
    %v243 = vpack.c.b16 %v231, %v230
    %v244 = vpack.c.b16 %v233, %v232
    %v245 = vpack.c.b16 %v235, %v234
    %v246 = vpack.c.b16 %v237, %v236
    %v247 = vpack.c.b16 %v239, %v238
    %256 = vmatprep.subr.bf16.mxu0 0
    %257 = vmatpush1.bf16.msra.mxu0 %v247
    %258 = vmatprep.subr.bf16.mxu0 0
    %259 = vmatpush1.bf16.msra.mxu0 %v246
    %260 = vmatprep.subr.bf16.mxu0 0
    %261 = vmatpush1.bf16.msra.mxu0 %v245
    %262 = vmatprep.subr.bf16.mxu0 0
    %263 = vmatpush1.bf16.msra.mxu0 %v244
    %264 = vmatprep.subr.bf16.mxu0 0
    %265 = vmatpush1.bf16.msra.mxu0 %v243
    %266 = vmatprep.subr.bf16.mxu0 0
    %267 = vmatpush1.bf16.msra.mxu0 %v242
    %268 = vmatprep.subr.bf16.mxu0 0
    %269 = vmatpush1.bf16.msra.mxu0 %v241
    %270 = vmatprep.subr.bf16.mxu0 0
    %271 = vmatpush1.bf16.msra.mxu0 %v240
    %272 = vmatprep.subr.bf16.mxu0 0
    %273 = vmatpush2.bf16.msra.mxu0 0
    %274 = vmatprep.subr.bf16.mxu0 0
    %275 = vmatpush2.bf16.msra.mxu0 0
    %276 = vmatprep.subr.bf16.mxu0 0
    %277 = vmatpush2.bf16.msra.mxu0 0
    %278 = vmatprep.subr.bf16.mxu0 0
    %279 = vmatpush2.bf16.msra.mxu0 0
    %280 = vmatprep.subr.bf16.mxu0 0
    %281 = vmatpush2.bf16.msra.mxu0 0
    %282 = vmatprep.subr.bf16.mxu0 0
    %283 = vmatpush2.bf16.msra.mxu0 0
    %284 = vmatprep.subr.bf16.mxu0 0
    %285 = vmatpush2.bf16.msra.mxu0 0
    %286 = vmatprep.subr.bf16.mxu0 0
    %287 = vmatpush2.bf16.msra.mxu0 0
    %288 = vmatprep.mubr.bf16.mxu0 0
    %289 = vmatmul.mubr.bf16.gmra.mxu0 %v187
    %v290 = vpop.f32.mrf.mxu0
    %v291 = vadd.f32 %v207, %v290
    %v292 = vpop.f32.mrf.mxu0
    %v293 = vpop.f32.mrf.mxu0
    %v294 = vadd.f32 %v207, %v293
    %v295 = vpop.f32.mrf.mxu0
    %296 = vdwg.mxu0
    %v297 = vmax.f32 %v291, 0.0
    %v298 = vmax.f32 %v294, 0.0
    %v299 = vpack.c.bf16 %v298, %v297
    %v300 = vld [vmem:[#allocation8] sm:$0xf]
    %v301 = vld [vmem:[#allocation8 + $0x4] sm:$0xf]
    %v302 = vld [vmem:[#allocation8 + $0x8] sm:$0xf]
    %v303 = vld [vmem:[#allocation8 + $0xc] sm:$0xf]
    %v304 = vld [vmem:[#allocation8 + $0x10] sm:$0xf]
    %v305 = vld [vmem:[#allocation8 + $0x14] sm:$0xf]
    %v306 = vld [vmem:[#allocation8 + $0x18] sm:$0xf]
    %v307 = vld [vmem:[#allocation8 + $0x1c] sm:$0xf]
    %v308 = vld [vmem:[#allocation8 + $0x20] sm:$0xf]
    %v309 = vld [vmem:[#allocation8 + $0x24] sm:$0xf]
    %v310 = vld [vmem:[#allocation8 + $0x28] sm:$0xf]
    %v311 = vld [vmem:[#allocation8 + $0x2c] sm:$0xf]
    %v312 = vld [vmem:[#allocation8 + $0x30] sm:$0xf]
    %v313 = vld [vmem:[#allocation8 + $0x34] sm:$0xf]
    %v314 = vld [vmem:[#allocation8 + $0x38] sm:$0xf]
    %v315 = vld [vmem:[#allocation8 + $0x3c] sm:$0xf]
    %v316 = vlaneseq
    %v317 = vshrl.u32 %v316, 7
    %v318 = vsub.s32 0, %v317
    %v319 = vrot.slane %v95, %v318
    %v336 = vunpack.c.l.b16 %v300
    %v337 = vunpack.c.l.b16 %v301
    %v338 = vunpack.c.l.b16 %v302
    %v339 = vunpack.c.l.b16 %v303
    %v340 = vunpack.c.l.b16 %v304
    %v341 = vunpack.c.l.b16 %v305
    %v342 = vunpack.c.l.b16 %v306
    %v343 = vunpack.c.l.b16 %v307
    %v344 = vunpack.c.l.b16 %v308
    %v345 = vunpack.c.l.b16 %v309
    %v346 = vunpack.c.l.b16 %v310
    %v347 = vunpack.c.l.b16 %v311
    %v348 = vunpack.c.l.b16 %v312
    %v349 = vunpack.c.l.b16 %v313
    %v350 = vunpack.c.l.b16 %v314
    %v351 = vunpack.c.l.b16 %v315
    %v352 = vpack.c.b16 %v337, %v336
    %v353 = vpack.c.b16 %v339, %v338
    %v354 = vpack.c.b16 %v341, %v340
    %v355 = vpack.c.b16 %v343, %v342
    %v356 = vpack.c.b16 %v345, %v344
    %v357 = vpack.c.b16 %v347, %v346
    %v358 = vpack.c.b16 %v349, %v348
    %v359 = vpack.c.b16 %v351, %v350
    %368 = vmatprep.subr.bf16.mxu0 0
    %369 = vmatpush1.bf16.msra.mxu0 %v359
    %370 = vmatprep.subr.bf16.mxu0 0
    %371 = vmatpush1.bf16.msra.mxu0 %v358
    %372 = vmatprep.subr.bf16.mxu0 0
    %373 = vmatpush1.bf16.msra.mxu0 %v357
    %374 = vmatprep.subr.bf16.mxu0 0
    %375 = vmatpush1.bf16.msra.mxu0 %v356
    %376 = vmatprep.subr.bf16.mxu0 0
    %377 = vmatpush1.bf16.msra.mxu0 %v355
    %378 = vmatprep.subr.bf16.mxu0 0
    %379 = vmatpush1.bf16.msra.mxu0 %v354
    %380 = vmatprep.subr.bf16.mxu0 0
    %381 = vmatpush1.bf16.msra.mxu0 %v353
    %382 = vmatprep.subr.bf16.mxu0 0
    %383 = vmatpush1.bf16.msra.mxu0 %v352
    %384 = vmatprep.subr.bf16.mxu0 0
    %385 = vmatpush2.bf16.msra.mxu0 0
    %386 = vmatprep.subr.bf16.mxu0 0
    %387 = vmatpush2.bf16.msra.mxu0 0
    %388 = vmatprep.subr.bf16.mxu0 0
    %389 = vmatpush2.bf16.msra.mxu0 0
    %390 = vmatprep.subr.bf16.mxu0 0
    %391 = vmatpush2.bf16.msra.mxu0 0
    %392 = vmatprep.subr.bf16.mxu0 0
    %393 = vmatpush2.bf16.msra.mxu0 0
    %394 = vmatprep.subr.bf16.mxu0 0
    %395 = vmatpush2.bf16.msra.mxu0 0
    %396 = vmatprep.subr.bf16.mxu0 0
    %397 = vmatpush2.bf16.msra.mxu0 0
    %398 = vmatprep.subr.bf16.mxu0 0
    %399 = vmatpush2.bf16.msra.mxu0 0
    %400 = vmatprep.mubr.bf16.mxu0 0
    %401 = vmatmul.mubr.bf16.gmra.mxu0 %v299
    %v402 = vpop.f32.mrf.mxu0
    %v403 = vadd.f32 %v319, %v402
    %v404 = vpop.f32.mrf.mxu0
    %v405 = vpop.f32.mrf.mxu0
    %v406 = vadd.f32 %v319, %v405
    %v407 = vpop.f32.mrf.mxu0
    %408 = vdwg.mxu0
    %v409 = vmax.f32 %v403, 0.0
    %v410 = vmax.f32 %v406, 0.0
    %v411 = vpack.c.bf16 %v410, %v409
    %v412 = vld [vmem:[#allocation10] sm:$0xf]
    %v413 = vld [vmem:[#allocation10 + $0x4] sm:$0xf]
    %v414 = vld [vmem:[#allocation10 + $0x8] sm:$0xf]
    %v415 = vld [vmem:[#allocation10 + $0xc] sm:$0xf]
    %v416 = vld [vmem:[#allocation10 + $0x10] sm:$0xf]
    %v417 = vld [vmem:[#allocation10 + $0x14] sm:$0xf]
    %v418 = vld [vmem:[#allocation10 + $0x18] sm:$0xf]
    %v419 = vld [vmem:[#allocation10 + $0x1c] sm:$0xf]
    %v420 = vld [vmem:[#allocation10 + $0x20] sm:$0xf]
    %v421 = vld [vmem:[#allocation10 + $0x24] sm:$0xf]
    %v422 = vld [vmem:[#allocation10 + $0x28] sm:$0xf]
    %v423 = vld [vmem:[#allocation10 + $0x2c] sm:$0xf]
    %v424 = vld [vmem:[#allocation10 + $0x30] sm:$0xf]
    %v425 = vld [vmem:[#allocation10 + $0x34] sm:$0xf]
    %v426 = vld [vmem:[#allocation10 + $0x38] sm:$0xf]
    %v427 = vld [vmem:[#allocation10 + $0x3c] sm:$0xf]
    %v428 = vlaneseq
    %v429 = vshrl.u32 %v428, 7
    %v430 = vsub.s32 0, %v429
    %v431 = vrot.slane %v96, %v430
    %v448 = vunpack.c.l.b16 %v412
    %v449 = vunpack.c.l.b16 %v413
    %v450 = vunpack.c.l.b16 %v414
    %v451 = vunpack.c.l.b16 %v415
    %v452 = vunpack.c.l.b16 %v416
    %v453 = vunpack.c.l.b16 %v417
    %v454 = vunpack.c.l.b16 %v418
    %v455 = vunpack.c.l.b16 %v419
    %v456 = vunpack.c.l.b16 %v420
    %v457 = vunpack.c.l.b16 %v421
    %v458 = vunpack.c.l.b16 %v422
    %v459 = vunpack.c.l.b16 %v423
    %v460 = vunpack.c.l.b16 %v424
    %v461 = vunpack.c.l.b16 %v425
    %v462 = vunpack.c.l.b16 %v426
    %v463 = vunpack.c.l.b16 %v427
    %v464 = vpack.c.b16 %v449, %v448
    %v465 = vpack.c.b16 %v451, %v450
    %v466 = vpack.c.b16 %v453, %v452
    %v467 = vpack.c.b16 %v455, %v454
    %v468 = vpack.c.b16 %v457, %v456
    %v469 = vpack.c.b16 %v459, %v458
    %v470 = vpack.c.b16 %v461, %v460
    %v471 = vpack.c.b16 %v463, %v462
    %480 = vmatprep.subr.bf16.mxu0 0
    %481 = vmatpush1.bf16.msra.mxu0 %v471
    %482 = vmatprep.subr.bf16.mxu0 0
    %483 = vmatpush1.bf16.msra.mxu0 %v470
    %484 = vmatprep.subr.bf16.mxu0 0
    %485 = vmatpush1.bf16.msra.mxu0 %v469
    %486 = vmatprep.subr.bf16.mxu0 0
    %487 = vmatpush1.bf16.msra.mxu0 %v468
    %488 = vmatprep.subr.bf16.mxu0 0
    %489 = vmatpush1.bf16.msra.mxu0 %v467
    %490 = vmatprep.subr.bf16.mxu0 0
    %491 = vmatpush1.bf16.msra.mxu0 %v466
    %492 = vmatprep.subr.bf16.mxu0 0
    %493 = vmatpush1.bf16.msra.mxu0 %v465
    %494 = vmatprep.subr.bf16.mxu0 0
    %495 = vmatpush1.bf16.msra.mxu0 %v464
    %496 = vmatprep.subr.bf16.mxu0 0
    %497 = vmatpush2.bf16.msra.mxu0 0
    %498 = vmatprep.subr.bf16.mxu0 0
    %499 = vmatpush2.bf16.msra.mxu0 0
    %500 = vmatprep.subr.bf16.mxu0 0
    %501 = vmatpush2.bf16.msra.mxu0 0
    %502 = vmatprep.subr.bf16.mxu0 0
    %503 = vmatpush2.bf16.msra.mxu0 0
    %504 = vmatprep.subr.bf16.mxu0 0
    %505 = vmatpush2.bf16.msra.mxu0 0
    %506 = vmatprep.subr.bf16.mxu0 0
    %507 = vmatpush2.bf16.msra.mxu0 0
    %508 = vmatprep.subr.bf16.mxu0 0
    %509 = vmatpush2.bf16.msra.mxu0 0
    %510 = vmatprep.subr.bf16.mxu0 0
    %511 = vmatpush2.bf16.msra.mxu0 0
    %512 = vmatprep.mubr.bf16.mxu0 0
    %513 = vmatmul.mubr.bf16.gmra.mxu0 %v411
    %v514 = vpop.f32.mrf.mxu0
    %v515 = vadd.f32 %v431, %v514
    %v516 = vpop.f32.mrf.mxu0
    %v517 = vpop.f32.mrf.mxu0
    %v518 = vadd.f32 %v431, %v517
    %v519 = vpop.f32.mrf.mxu0
    %520 = vdwg.mxu0
    %521 = vst [vmem:[#allocation11] sm:$0xff] %v515
    %522 = vst [vmem:[#allocation11 + $0x8] sm:$0xff] %v518
    // Predicated region
    $region46: #{tpu_custom_call.1} parent=1 // pred_check
      _
    $region47: #{tpu_custom_call.1} parent=1 // pred_check_branch
      %524 = sbr.rel (0) target = $region49
    $region48: #{tpu_custom_call.1} parent=1 // pred_region
      %s526 = ssub.s32 256, 256
      %527 = vsyncadd [#allocation4], %s526
      %s528 = sshll.u32 [#allocation11], 4
      %s529 = int_to_ptr.vmem [resolvable:$true] %s528
      %534 = dma.vmem_to_hbm [thread:$0]  %s529, 256, %s6, [#allocation4], 128, 128, 8
    $region49: #{tpu_custom_call.1} parent=1 // pred_fallthru
      _
    // Predicated region
    $region50: #{tpu_custom_call.1} parent=1 // pred_check
      _
    $region51: #{tpu_custom_call.1} parent=1 // pred_check_branch
      %536 = sbr.rel (0) target = $region53
    $region52: #{tpu_custom_call.1} parent=1 // pred_region
      %537 = dma.done [#allocation4], 256
    $region53: #{tpu_custom_call.1} parent=1 // pred_fallthru
      _
    %538 = vsyncpa [#allocation3], 1
    %539 = vsyncpa [#allocation6], 1
    %540 = vsyncpa [#allocation9], 1
    %541 = vsyncpa [#allocation4], 1

</llo_original>
